<compile_context>
chip_gen: v5e
topology: v5e:2x2
jax: 0.10.0
libtpu: 0.0.40
codegen_flags: <defaults>
</compile_context>

<pallas_src>
import jax
import jax.numpy as jnp
from jax.experimental import pallas as pl
from jax.experimental.pallas import tpu as pltpu


LANE = 128
SUB_BF16 = 16                      # bf16 sublane pack (rows per vreg group)
VMEM_LIMIT = 48 * 1024 * 1024      # explicit scoped-VMEM request (> v5e 16MiB default)


def _round_up(x, m):
    return (x + m - 1) // m * m


def _full_spec(shape):
    n = len(shape)
    return pl.BlockSpec(shape, lambda: (0,) * n)


# ---------------------------------------------------------------------------
# One-time parameter preparation (hoisted out of the forward path).
# ---------------------------------------------------------------------------
def _fuse_pad_gate(w, b, wp, bp, in_pad, out_pad):
    """Concat [W | 0.5*W'] along the output dim, zero-padding rows to in_pad
    and each half's columns to out_pad; bf16 weights, f32 bias.

    The 0.5 scale lets the kernel compute the sigmoid gate with the same tanh
    pass:  sigmoid(u) = 0.5*tanh(u/2) + 0.5.  Zero padding is exact: padded
    output columns give tanh(0) * (0.5*tanh(0)+0.5) = 0, and padded input rows
    only ever multiply zero-padded activation columns.
    """
    din, dout = w.shape
    pw = ((0, in_pad - din), (0, out_pad - dout))
    pb = ((0, 0), (0, out_pad - dout))
    w2 = jnp.concatenate([jnp.pad(w, pw), 0.5 * jnp.pad(wp, pw)], axis=1)
    b2 = jnp.concatenate([jnp.pad(b, pb), 0.5 * jnp.pad(bp, pb)], axis=1)
    return w2.astype(jnp.bfloat16), b2.astype(jnp.float32)


def prepare_params(params):
    """Fuse/pad/cast all weights once. Reuse the result for every forward call."""
    wq, bq = params["gt_W_question"]
    wpq, bpq = params["gt_W_prime_question"]
    wk, bk = params["gt_W_knowledge"]
    wpk, bpk = params["gt_W_prime_knowledge"]
    wn, bn = params["h_W_n"]
    wpn, bpn = params["h_W_prime_n"]
    wi, bi = params["gt_W_img"]
    wpi, bpi = params["gt_W_prime_img"]
    wc, bc = params["classifier"]

    task_v, hid = wq.shape
    feat_in = wi.shape[0]
    feat = wn.shape[1]
    ncls = wc.shape[1]

    task_v_p = _round_up(task_v, LANE)
    hid_p = _round_up(hid, LANE)
    feat_p = _round_up(feat, LANE)
    feat_in_p = _round_up(feat_in, LANE)
    ncls_p = _round_up(ncls, LANE)

    wq2, bq2 = _fuse_pad_gate(wq, bq, wpq, bpq, task_v_p, hid_p)
    wk2, bk2 = _fuse_pad_gate(wk, bk, wpk, bpk, task_v_p, hid_p)
    wn2, bn2 = _fuse_pad_gate(wn, bn, wpn, bpn, hid_p, feat_p)
    wi2, bi2 = _fuse_pad_gate(wi, bi, wpi, bpi, feat_in_p, hid_p)
    wc_p = jnp.pad(wc, ((0, feat_p - feat), (0, ncls_p - ncls))).astype(jnp.bfloat16)
    bc_p = jnp.pad(bc, ((0, 0), (0, ncls_p - ncls))).astype(jnp.float32)

    dims = dict(task_v=task_v, task_v_p=task_v_p, hid=hid, hid_p=hid_p,
                feat=feat, feat_p=feat_p, feat_in=feat_in, feat_in_p=feat_in_p,
                ncls=ncls, ncls_p=ncls_p)
    return dict(dims=dims,
                wq2=wq2, bq2=bq2, wk2=wk2, bk2=bk2, wn2=wn2, bn2=bn2,
                wi2=wi2, bi2=bi2, wc=wc_p, bc=bc_p)


# ---------------------------------------------------------------------------
# Kernel 1: fused gated-tanh  y = tanh(x W + b) * sigmoid(x W' + b')
# Single wide matmul against [Din_p, 2*out_p]; single tanh pass for the gate.
# (mode == 'v_vqa')
# ---------------------------------------------------------------------------
def _gated_tanh_kernel(x_ref, w2_ref, b2_ref, y_ref):
    d = y_ref.shape[-1]
    z = jnp.dot(x_ref[...], w2_ref[...], preferred_element_type=jnp.float32) + b2_ref[...]
    t = jnp.tanh(z)                                 # one EUP pass over 2*d cols
    y_ref[...] = t[:, :d] * (0.5 * t[:, d:] + 0.5)  # tanh(u) * sigmoid(u')


# ---------------------------------------------------------------------------
# Kernel 2: fully fused 'output' mode, gridded over batch tiles.
#   Qgt  = gated_tanh(Q)                        [bt, hid_p]      (bf16)
#   Kgt  = gated_tanh(k tile, all T at once)    [T*bt, hid_p]    (bf16)
#   h    = Kgt * broadcast_T(Qgt)               [T*bt, hid_p]    (bf16)
#   n_h  = gated_tanh(h)                        [T*bt, feat_p]   (bf16)
#   y    = (sum_t n_h_t) @ Wc + T*bc            [bt, ncls_p]     (f32)
# ---------------------------------------------------------------------------
def _vqa_output_kernel(q_ref, k_ref,
                       wq2_ref, bq2_ref,
                       wk2_ref, bk2_ref,
                       wn2_ref, bn2_ref,
                       wc_ref, bc_ref,
                       y_ref):
    hid_p = wq2_ref.shape[1] // 2
    feat_p = wn2_ref.shape[1] // 2
    T, bt, dq = k_ref.shape

    # Question path (per batch tile).
    zq = jnp.dot(q_ref[...], wq2_ref[...], preferred_element_type=jnp.float32) + bq2_ref[...]
    tq = jnp.tanh(zq)
    qgt = (tq[:, :hid_p] * (0.5 * tq[:, hid_p:] + 0.5)).astype(jnp.bfloat16)

    # Knowledge path: all T slices of this batch tile in one wide matmul.
    k = k_ref[...].reshape(T * bt, dq)              # bt % 16 == 0 -> free reshape
    zk = jnp.dot(k, wk2_ref[...], preferred_element_type=jnp.float32) + bk2_ref[...]
    tk = jnp.tanh(zk)
    kgt = (tk[:, :hid_p] * (0.5 * tk[:, hid_p:] + 0.5)).astype(jnp.bfloat16)

    # h = Qgt (broadcast over T) * Kgt, kept in bf16 for the next MXU op.
    h = (kgt.reshape(T, bt, hid_p) * qgt[None]).reshape(T * bt, hid_p)

    zn = jnp.dot(h, wn2_ref[...], preferred_element_type=jnp.float32) + bn2_ref[...]
    tn = jnp.tanh(zn)
    n_h = (tn[:, :feat_p] * (0.5 * tn[:, feat_p:] + 0.5)).astype(jnp.bfloat16)

    # Sum over T with f32 accumulate, then a single classifier matmul.
    # sum distributes over the linear layer, so y = n_sum @ Wc + T * bc exactly.
    n_sum = n_h.reshape(T, bt, feat_p).astype(jnp.float32).sum(axis=0)
    y_ref[...] = (jnp.dot(n_sum.astype(jnp.bfloat16), wc_ref[...],
                          preferred_element_type=jnp.float32)
                  + float(T) * bc_ref[...])


def _choose_batch_tile(bp):
    if bp <= 256:
        return bp
    for bt in (256, 128, 64, 32, 16):
        if bp % bt == 0:
            return bt
    return bp  # unreachable: bp is a multiple of 16


def vqa_output(Q, k_ts, prep):
    """mode == 'output'.  Q: [B, task_v], k_ts: [T, B, task_v] -> [B, num_class]."""
    d = prep["dims"]
    T, B, dq = k_ts.shape
    dq_p, hid_p, feat_p, ncls_p = d["task_v_p"], d["hid_p"], d["feat_p"], d["ncls_p"]

    bp = _round_up(max(B, SUB_BF16), SUB_BF16)   # sublane-aligned batch (bf16)
    bt = _choose_batch_tile(bp)

    # Activation-only prep: zero-pad batch/task_v and cast to bf16 (lane-dense,
    # half-width DMA). Weight prep is already done in `prep`.
    q_pad = jnp.pad(Q, ((0, bp - B), (0, dq_p - dq))).astype(jnp.bfloat16)
    k_pad = jnp.pad(k_ts, ((0, 0), (0, bp - B), (0, dq_p - dq))).astype(jnp.bfloat16)

    cost = pl.CostEstimate(
        flops=int(2 * (bp * dq_p * 2 * hid_p
                       + T * bp * dq_p * 2 * hid_p
                       + T * bp * hid_p * 2 * feat_p
                       + bp * feat_p * ncls_p)),
        transcendentals=int(2 * bp * hid_p + 2 * T * bp * hid_p + 2 * T * bp * feat_p),
        bytes_accessed=int((q_pad.size + k_pad.size) * 2
                           + (prep["wq2"].size + prep["wk2"].size
                              + prep["wn2"].size + prep["wc"].size) * 2
                           + (prep["bq2"].size + prep["bk2"].size
                              + prep["bn2"].size + prep["bc"].size) * 4
                           + bp * ncls_p * 4),
    )

    const2d = lambda i: (0, 0)   # resident weights: same block every step -> fetched once

    y_pad = pl.pallas_call(
        _vqa_output_kernel,
        out_shape=jax.ShapeDtypeStruct((bp, ncls_p), jnp.float32),
        grid_spec=pltpu.PrefetchScalarGridSpec(
            num_scalar_prefetch=0,
            grid=(bp // bt,),
            in_specs=[
                pl.BlockSpec((bt, dq_p), lambda i: (i, 0)),
                pl.BlockSpec((T, bt, dq_p), lambda i: (0, i, 0)),
                pl.BlockSpec(prep["wq2"].shape, const2d),
                pl.BlockSpec(prep["bq2"].shape, const2d),
                pl.BlockSpec(prep["wk2"].shape, const2d),
                pl.BlockSpec(prep["bk2"].shape, const2d),
                pl.BlockSpec(prep["wn2"].shape, const2d),
                pl.BlockSpec(prep["bn2"].shape, const2d),
                pl.BlockSpec(prep["wc"].shape, const2d),
                pl.BlockSpec(prep["bc"].shape, const2d),
            ],
            out_specs=pl.BlockSpec((bt, ncls_p), lambda i: (i, 0)),
        ),
        compiler_params=pltpu.CompilerParams(
            dimension_semantics=("parallel",),
            vmem_limit_bytes=VMEM_LIMIT),
        cost_estimate=cost,
    )(q_pad, k_pad, prep["wq2"], prep["bq2"], prep["wk2"], prep["bk2"],
      prep["wn2"], prep["bn2"], prep["wc"], prep["bc"])

    return y_pad[:B, :d["ncls"]]


def vqa_v_vqa(v_head, prep):
    """mode == 'v_vqa': gated_tanh(v_head; gt_W_img, gt_W_prime_img) -> [B, hid]."""
    d = prep["dims"]
    B, fi = v_head.shape
    fi_p, hid_p = d["feat_in_p"], d["hid_p"]
    bp = _round_up(max(B, SUB_BF16), SUB_BF16)
    x = jnp.pad(v_head, ((0, bp - B), (0, fi_p - fi))).astype(jnp.bfloat16)

    cost = pl.CostEstimate(
        flops=int(2 * bp * fi_p * 2 * hid_p),
        transcendentals=int(2 * bp * hid_p),
        bytes_accessed=int(x.size * 2 + prep["wi2"].size * 2
                           + prep["bi2"].size * 4 + bp * hid_p * 4),
    )
    y_pad = pl.pallas_call(
        _gated_tanh_kernel,
        out_shape=jax.ShapeDtypeStruct((bp, hid_p), jnp.float32),
        in_specs=[_full_spec((bp, fi_p)),
                  _full_spec(prep["wi2"].shape),
                  _full_spec(prep["bi2"].shape)],
        out_specs=_full_spec((bp, hid_p)),
        compiler_params=pltpu.CompilerParams(vmem_limit_bytes=VMEM_LIMIT),
        cost_estimate=cost,
    )(x, prep["wi2"], prep["bi2"])
    return y_pad[:B, :d["hid"]]


# ---------------------------------------------------------------------------
# Deterministic parameter construction (mimics nn.Linear U[-1/sqrt(in), ...]).
# Weights stored [in, out] (already transposed from PyTorch's [out, in]).
# ---------------------------------------------------------------------------
def init_params(key, task_v_size, feat_dim, hid_dim, num_class):
    def linear(key, din, dout):
        kw, kb = jax.random.split(key)
        bound = 1.0 / (din ** 0.5)
        w = jax.random.uniform(kw, (din, dout), jnp.float32, -bound, bound)
        b = jax.random.uniform(kb, (1, dout), jnp.float32, -bound, bound)
        return (w, b)

    names_dims = [
        ("gt_W_question", task_v_size, hid_dim),
        ("gt_W_prime_question", task_v_size, hid_dim),
        ("gt_W_img", feat_dim, hid_dim),
        ("gt_W_prime_img", feat_dim, hid_dim),
        ("h_W_img", hid_dim, feat_dim),
        ("h_W_prime_img", hid_dim, feat_dim),
        ("classifier", feat_dim, num_class),
        ("gt_W_knowledge", task_v_size, hid_dim),
        ("gt_W_prime_knowledge", task_v_size, hid_dim),
        ("h_W_n", hid_dim, feat_dim),
        ("h_W_prime_n", hid_dim, feat_dim),
    ]
    keys = jax.random.split(key, len(names_dims))
    return {n: linear(k, di, do) for k, (n, di, do) in zip(keys, names_dims)}


# Pure-JAX f32 reference (mirrors the PyTorch forward) for verification.
def _ref_gated_tanh(x, w, b, wp, bp):
    return jnp.tanh(x @ w + b) * jax.nn.sigmoid(x @ wp + bp)


def _ref_output(Q, k_ts, p):
    qgt = _ref_gated_tanh(Q, *p["gt_W_question"], *p["gt_W_prime_question"])
    y = 0.0
    for i in range(k_ts.shape[0]):
        kt = _ref_gated_tanh(k_ts[i], *p["gt_W_knowledge"], *p["gt_W_prime_knowledge"])
        h = qgt * kt
        nh = _ref_gated_tanh(h, *p["h_W_n"], *p["h_W_prime_n"])
        wc, bc = p["classifier"]
        y = y + (nh @ wc + bc)
    return y


if __name__ == "__main__":
    # Small shapes consistent with the module's forward.
    B = 8              # batch
    task_v_size = 32
    feat_dim = 32
    hid_dim = 32
    num_class = 16
    T = 3              # number of knowledge vectors k_ts

    key = jax.random.PRNGKey(0)
    kp, kq, kk, kv = jax.random.split(key, 4)
    params = init_params(kp, task_v_size, feat_dim, hid_dim, num_class)

    # One-time weight preparation (hoisted out of the forward path).
    prep = jax.tree_util.tree_map(jax.block_until_ready, prepare_params(params))

    Q = jax.random.normal(kq, (B, task_v_size), jnp.float32)
    k_ts = jax.random.normal(kk, (T, B, task_v_size), jnp.float32)
    v_head = jax.random.normal(kv, (B, feat_dim), jnp.float32)

    # mode == 'output'  (bf16 MXU operands + bf16 intermediates -> loosened tol)
    y_vqa = jax.block_until_ready(vqa_output(Q, k_ts, prep))
    y_ref = _ref_output(Q, k_ts, params)
    assert y_vqa.shape == y_ref.shape
    assert jnp.allclose(y_vqa, y_ref, atol=1.5e-1, rtol=1e-1), "output mode mismatch"

    # mode == 'v_vqa'
    v_vqa = jax.block_until_ready(vqa_v_vqa(v_head, prep))
    v_ref = _ref_gated_tanh(v_head, *params["gt_W_img"], *params["gt_W_prime_img"])
    assert v_vqa.shape == v_ref.shape
    assert jnp.allclose(v_vqa, v_ref, atol=7.5e-2, rtol=5e-2), "v_vqa mode mismatch"

    print("KERNEL_OK")
</pallas_src>

<mosaic_0001>
module attributes {stable_mosaic.version = 11 : i64} {
  func.func @_vqa_output_kernel(%arg0: i32, %arg1: memref<16x128xbf16, #tpu.memory_space<vmem>>, %arg2: memref<3x16x128xbf16, #tpu.memory_space<vmem>>, %arg3: memref<128x256xbf16, #tpu.memory_space<vmem>>, %arg4: memref<1x256xf32, #tpu.memory_space<vmem>>, %arg5: memref<128x256xbf16, #tpu.memory_space<vmem>>, %arg6: memref<1x256xf32, #tpu.memory_space<vmem>>, %arg7: memref<128x256xbf16, #tpu.memory_space<vmem>>, %arg8: memref<1x256xf32, #tpu.memory_space<vmem>>, %arg9: memref<128x128xbf16, #tpu.memory_space<vmem>>, %arg10: memref<1x128xf32, #tpu.memory_space<vmem>>, %arg11: memref<16x128xf32, #tpu.memory_space<vmem>>) attributes {dimension_semantics = [#tpu.dimension_semantics<parallel>], iteration_bounds = array<i64: 1>, scalar_prefetch = 0 : i64, scratch_operands = 0 : i64, tpu.core_type = #tpu.core_type<tc>, window_params = [{transform_indices = @transform_0, window_bounds = array<i64: 16, 128>}, {transform_indices = @transform_1, window_bounds = array<i64: 3, 16, 128>}, {pipeline_mode = #tpu.pipeline_mode<synchronous>, transform_indices = @transform_2, window_bounds = array<i64: 128, 256>}, {pipeline_mode = #tpu.pipeline_mode<synchronous>, transform_indices = @transform_3, window_bounds = array<i64: 1, 256>}, {pipeline_mode = #tpu.pipeline_mode<synchronous>, transform_indices = @transform_4, window_bounds = array<i64: 128, 256>}, {pipeline_mode = #tpu.pipeline_mode<synchronous>, transform_indices = @transform_5, window_bounds = array<i64: 1, 256>}, {pipeline_mode = #tpu.pipeline_mode<synchronous>, transform_indices = @transform_6, window_bounds = array<i64: 128, 256>}, {pipeline_mode = #tpu.pipeline_mode<synchronous>, transform_indices = @transform_7, window_bounds = array<i64: 1, 256>}, {pipeline_mode = #tpu.pipeline_mode<synchronous>, transform_indices = @transform_8, window_bounds = array<i64: 128, 128>}, {pipeline_mode = #tpu.pipeline_mode<synchronous>, transform_indices = @transform_9, window_bounds = array<i64: 1, 128>}, {transform_indices = @transform_10, window_bounds = array<i64: 16, 128>}]} {
    %c0 = arith.constant 0 : index
    %c0_0 = arith.constant 0 : index
    %0 = vector.load %arg1[%c0, %c0_0] : memref<16x128xbf16, #tpu.memory_space<vmem>>, vector<16x128xbf16>
    %c0_1 = arith.constant 0 : index
    %c0_2 = arith.constant 0 : index
    %1 = vector.load %arg3[%c0_1, %c0_2] : memref<128x256xbf16, #tpu.memory_space<vmem>>, vector<128x256xbf16>
    %cst = arith.constant dense<0.000000e+00> : vector<16x256xf32>
    %2 = tpu.matmul %0, %1, %cst {dimension_numbers = #tpu.dot_dimension_numbers<[1], [0], [0], [1], [0, 0, 1, 1], [], []>} : vector<16x128xbf16>, vector<128x256xbf16>, vector<16x256xf32> -> vector<16x256xf32>
    %c0_3 = arith.constant 0 : index
    %c0_4 = arith.constant 0 : index
    %3 = vector.load %arg4[%c0_3, %c0_4] : memref<1x256xf32, #tpu.memory_space<vmem>>, vector<1x256xf32>
    %4 = vector.broadcast %3 : vector<1x256xf32> to vector<16x256xf32>
    %5 = arith.addf %2, %4 : vector<16x256xf32>
    %6 = math.tanh %5 : vector<16x256xf32>
    %7 = vector.extract_strided_slice %6 {offsets = [0, 0], sizes = [16, 128], strides = [1, 1]} : vector<16x256xf32> to vector<16x128xf32>
    %8 = vector.extract_strided_slice %6 {offsets = [0, 128], sizes = [16, 128], strides = [1, 1]} : vector<16x256xf32> to vector<16x128xf32>
    %cst_5 = arith.constant 5.000000e-01 : f32
    %9 = vector.broadcast %cst_5 : f32 to vector<16x128xf32>
    %10 = arith.mulf %9, %8 : vector<16x128xf32>
    %cst_6 = arith.constant 5.000000e-01 : f32
    %11 = vector.broadcast %cst_6 : f32 to vector<16x128xf32>
    %12 = arith.addf %10, %11 : vector<16x128xf32>
    %13 = arith.mulf %7, %12 : vector<16x128xf32>
    %14 = arith.truncf %13 : vector<16x128xf32> to vector<16x128xbf16>
    %c0_7 = arith.constant 0 : index
    %c0_8 = arith.constant 0 : index
    %c0_9 = arith.constant 0 : index
    %15 = vector.load %arg2[%c0_7, %c0_8, %c0_9] : memref<3x16x128xbf16, #tpu.memory_space<vmem>>, vector<3x16x128xbf16>
    %16 = vector.shape_cast %15 : vector<3x16x128xbf16> to vector<48x128xbf16>
    %c0_10 = arith.constant 0 : index
    %c0_11 = arith.constant 0 : index
    %17 = vector.load %arg5[%c0_10, %c0_11] : memref<128x256xbf16, #tpu.memory_space<vmem>>, vector<128x256xbf16>
    %cst_12 = arith.constant dense<0.000000e+00> : vector<48x256xf32>
    %18 = tpu.matmul %16, %17, %cst_12 {dimension_numbers = #tpu.dot_dimension_numbers<[1], [0], [0], [1], [0, 0, 1, 1], [], []>} : vector<48x128xbf16>, vector<128x256xbf16>, vector<48x256xf32> -> vector<48x256xf32>
    %c0_13 = arith.constant 0 : index
    %c0_14 = arith.constant 0 : index
    %19 = vector.load %arg6[%c0_13, %c0_14] : memref<1x256xf32, #tpu.memory_space<vmem>>, vector<1x256xf32>
    %20 = vector.broadcast %19 : vector<1x256xf32> to vector<48x256xf32>
    %21 = arith.addf %18, %20 : vector<48x256xf32>
    %22 = math.tanh %21 : vector<48x256xf32>
    %23 = vector.extract_strided_slice %22 {offsets = [0, 0], sizes = [48, 128], strides = [1, 1]} : vector<48x256xf32> to vector<48x128xf32>
    %24 = vector.extract_strided_slice %22 {offsets = [0, 128], sizes = [48, 128], strides = [1, 1]} : vector<48x256xf32> to vector<48x128xf32>
    %cst_15 = arith.constant 5.000000e-01 : f32
    %25 = vector.broadcast %cst_15 : f32 to vector<48x128xf32>
    %26 = arith.mulf %25, %24 : vector<48x128xf32>
    %cst_16 = arith.constant 5.000000e-01 : f32
    %27 = vector.broadcast %cst_16 : f32 to vector<48x128xf32>
    %28 = arith.addf %26, %27 : vector<48x128xf32>
    %29 = arith.mulf %23, %28 : vector<48x128xf32>
    %30 = arith.truncf %29 : vector<48x128xf32> to vector<48x128xbf16>
    %31 = vector.shape_cast %30 : vector<48x128xbf16> to vector<3x16x128xbf16>
    %32 = vector.shape_cast %14 : vector<16x128xbf16> to vector<1x16x128xbf16>
    %33 = vector.broadcast %32 : vector<1x16x128xbf16> to vector<3x16x128xbf16>
    %34 = arith.mulf %31, %33 : vector<3x16x128xbf16>
    %35 = vector.shape_cast %34 : vector<3x16x128xbf16> to vector<48x128xbf16>
    %c0_17 = arith.constant 0 : index
    %c0_18 = arith.constant 0 : index
    %36 = vector.load %arg7[%c0_17, %c0_18] : memref<128x256xbf16, #tpu.memory_space<vmem>>, vector<128x256xbf16>
    %cst_19 = arith.constant dense<0.000000e+00> : vector<48x256xf32>
    %37 = tpu.matmul %35, %36, %cst_19 {dimension_numbers = #tpu.dot_dimension_numbers<[1], [0], [0], [1], [0, 0, 1, 1], [], []>} : vector<48x128xbf16>, vector<128x256xbf16>, vector<48x256xf32> -> vector<48x256xf32>
    %c0_20 = arith.constant 0 : index
    %c0_21 = arith.constant 0 : index
    %38 = vector.load %arg8[%c0_20, %c0_21] : memref<1x256xf32, #tpu.memory_space<vmem>>, vector<1x256xf32>
    %39 = vector.broadcast %38 : vector<1x256xf32> to vector<48x256xf32>
    %40 = arith.addf %37, %39 : vector<48x256xf32>
    %41 = math.tanh %40 : vector<48x256xf32>
    %42 = vector.extract_strided_slice %41 {offsets = [0, 0], sizes = [48, 128], strides = [1, 1]} : vector<48x256xf32> to vector<48x128xf32>
    %43 = vector.extract_strided_slice %41 {offsets = [0, 128], sizes = [48, 128], strides = [1, 1]} : vector<48x256xf32> to vector<48x128xf32>
    %cst_22 = arith.constant 5.000000e-01 : f32
    %44 = vector.broadcast %cst_22 : f32 to vector<48x128xf32>
    %45 = arith.mulf %44, %43 : vector<48x128xf32>
    %cst_23 = arith.constant 5.000000e-01 : f32
    %46 = vector.broadcast %cst_23 : f32 to vector<48x128xf32>
    %47 = arith.addf %45, %46 : vector<48x128xf32>
    %48 = arith.mulf %42, %47 : vector<48x128xf32>
    %49 = arith.truncf %48 : vector<48x128xf32> to vector<48x128xbf16>
    %50 = vector.shape_cast %49 : vector<48x128xbf16> to vector<3x16x128xbf16>
    %51 = arith.extf %50 : vector<3x16x128xbf16> to vector<3x16x128xf32>
    %cst_24 = arith.constant dense<0.000000e+00> : vector<16x128xf32>
    %52 = vector.multi_reduction <add>, %51, %cst_24 [0] : vector<3x16x128xf32> to vector<16x128xf32>
    %53 = arith.truncf %52 : vector<16x128xf32> to vector<16x128xbf16>
    %c0_25 = arith.constant 0 : index
    %c0_26 = arith.constant 0 : index
    %54 = vector.load %arg9[%c0_25, %c0_26] : memref<128x128xbf16, #tpu.memory_space<vmem>>, vector<128x128xbf16>
    %cst_27 = arith.constant dense<0.000000e+00> : vector<16x128xf32>
    %55 = tpu.matmul %53, %54, %cst_27 {dimension_numbers = #tpu.dot_dimension_numbers<[1], [0], [0], [1], [0, 0, 1, 1], [], []>} : vector<16x128xbf16>, vector<128x128xbf16>, vector<16x128xf32> -> vector<16x128xf32>
    %c0_28 = arith.constant 0 : index
    %c0_29 = arith.constant 0 : index
    %56 = vector.load %arg10[%c0_28, %c0_29] : memref<1x128xf32, #tpu.memory_space<vmem>>, vector<1x128xf32>
    %cst_30 = arith.constant 3.000000e+00 : f32
    %57 = vector.broadcast %cst_30 : f32 to vector<1x128xf32>
    %58 = arith.mulf %57, %56 : vector<1x128xf32>
    %59 = vector.broadcast %58 : vector<1x128xf32> to vector<16x128xf32>
    %60 = arith.addf %55, %59 : vector<16x128xf32>
    %c0_31 = arith.constant 0 : index
    %c0_32 = arith.constant 0 : index
    %61 = vector.load %arg11[%c0_31, %c0_32] : memref<16x128xf32, #tpu.memory_space<vmem>>, vector<16x128xf32>
    tpu.vector_store %arg11[%c0_31, %c0_32], %60 {strides = array<i32>} : memref<16x128xf32, #tpu.memory_space<vmem>>, vector<16x128xf32>,
    return
  }
  func.func @transform_0(%arg0: i32) -> (i32, i32) {
    %c0_i32 = arith.constant 0 : i32
    %c0_i32_0 = arith.constant 0 : i32
    return %arg0, %c0_i32 : i32, i32
  }
  func.func @transform_1(%arg0: i32) -> (i32, i32, i32) {
    %c0_i32 = arith.constant 0 : i32
    %c0_i32_0 = arith.constant 0 : i32
    %c0_i32_1 = arith.constant 0 : i32
    return %c0_i32, %arg0, %c0_i32_0 : i32, i32, i32
  }
  func.func @transform_2(%arg0: i32) -> (i32, i32) {
    %c0_i32 = arith.constant 0 : i32
    %c0_i32_0 = arith.constant 0 : i32
    %c0_i32_1 = arith.constant 0 : i32
    return %c0_i32, %c0_i32_0 : i32, i32
  }
  func.func @transform_3(%arg0: i32) -> (i32, i32) {
    %c0_i32 = arith.constant 0 : i32
    %c0_i32_0 = arith.constant 0 : i32
    %c0_i32_1 = arith.constant 0 : i32
    return %c0_i32, %c0_i32_0 : i32, i32
  }
  func.func @transform_4(%arg0: i32) -> (i32, i32) {
    %c0_i32 = arith.constant 0 : i32
    %c0_i32_0 = arith.constant 0 : i32
    %c0_i32_1 = arith.constant 0 : i32
    return %c0_i32, %c0_i32_0 : i32, i32
  }
  func.func @transform_5(%arg0: i32) -> (i32, i32) {
    %c0_i32 = arith.constant 0 : i32
    %c0_i32_0 = arith.constant 0 : i32
    %c0_i32_1 = arith.constant 0 : i32
    return %c0_i32, %c0_i32_0 : i32, i32
  }
  func.func @transform_6(%arg0: i32) -> (i32, i32) {
    %c0_i32 = arith.constant 0 : i32
    %c0_i32_0 = arith.constant 0 : i32
    %c0_i32_1 = arith.constant 0 : i32
    return %c0_i32, %c0_i32_0 : i32, i32
  }
  func.func @transform_7(%arg0: i32) -> (i32, i32) {
    %c0_i32 = arith.constant 0 : i32
    %c0_i32_0 = arith.constant 0 : i32
    %c0_i32_1 = arith.constant 0 : i32
    return %c0_i32, %c0_i32_0 : i32, i32
  }
  func.func @transform_8(%arg0: i32) -> (i32, i32) {
    %c0_i32 = arith.constant 0 : i32
    %c0_i32_0 = arith.constant 0 : i32
    %c0_i32_1 = arith.constant 0 : i32
    return %c0_i32, %c0_i32_0 : i32, i32
  }
  func.func @transform_9(%arg0: i32) -> (i32, i32) {
    %c0_i32 = arith.constant 0 : i32
    %c0_i32_0 = arith.constant 0 : i32
    %c0_i32_1 = arith.constant 0 : i32
    return %c0_i32, %c0_i32_0 : i32, i32
  }
  func.func @transform_10(%arg0: i32) -> (i32, i32) {
    %c0_i32 = arith.constant 0 : i32
    %c0_i32_0 = arith.constant 0 : i32
    return %arg0, %c0_i32 : i32, i32
  }
}

</mosaic_0001>

<llo_original>
// kernel: tpu_custom_call.1
$region0: #{tpu_custom_call.1}
  #allocation0 [shape = 'u32[]', space=smem, size = 0x4, offset = 0x4, fixed_abs, tag = 'smem constant byte address 0x4 - core index']
  #allocation1 [shape = 'u32[72,128]{1,0:T(1,128)}', space=vmem, size = 0x9000, scoped, tag = 'internal scratch']
  %s0 = inlined_call_operand.hbm [shape: bf16[16,128], index: 0, kind: input, shape index: {}]
  %s1 = inlined_call_operand.hbm [shape: bf16[3,16,128], index: 1, kind: input, shape index: {}]
  %s2 = inlined_call_operand.hbm [shape: bf16[128,256], index: 2, kind: input, shape index: {}]
  %s3 = inlined_call_operand.vmem [shape: f32[1,256], index: 3, kind: input, shape index: {}]
  %s4 = inlined_call_operand.hbm [shape: bf16[128,256], index: 4, kind: input, shape index: {}]
  %s5 = inlined_call_operand.vmem [shape: f32[1,256], index: 5, kind: input, shape index: {}]
  %s6 = inlined_call_operand.hbm [shape: bf16[128,256], index: 6, kind: input, shape index: {}]
  %s7 = inlined_call_operand.vmem [shape: f32[1,256], index: 7, kind: input, shape index: {}]
  %s8 = inlined_call_operand.hbm [shape: bf16[128,128], index: 8, kind: input, shape index: {}]
  %s9 = inlined_call_operand.vmem [shape: f32[1,128], index: 9, kind: input, shape index: {}]
  %s10 = inlined_call_operand.hbm [shape: f32[16,128], index: 10, kind: output, shape index: {}]
  %s11 = sld [smem:[#allocation0]]
  $region74: #{tpu_custom_call.1} parent=0
    _
  %s13 = ssub.s32 1, %s11
  %s14 = scalar_select 0, %s13, %s11
  $region1: #{tpu_custom_call.1} parent=0
    #allocation2 [shape = 'u8[4096]{0}', space=vmem, size = 0x1000, scoped, tag = 'input window, operand 0, single buffered']
    #allocation3 [shape = 's32[1]{0}', space=sflag, size = 0x4, scoped, tag = 'scoped memory for tpu_custom_call.1']
    #allocation4 [shape = 's32[1]{0}', space=sflag, size = 0x4, scoped, tag = 'scoped memory for tpu_custom_call.1']
    #allocation5 [shape = 'u8[12288]{0}', space=vmem, size = 0x3000, scoped, tag = 'input window, operand 1, single buffered']
    #allocation6 [shape = 's32[1]{0}', space=sflag, size = 0x4, scoped, tag = 'scoped memory for tpu_custom_call.1']
    #allocation7 [shape = 'u8[65536]{0}', space=vmem, size = 0x10000, scoped, tag = 'input window, operand 2, single buffered']
    #allocation8 [shape = 'u8[65536]{0}', space=vmem, size = 0x10000, scoped, tag = 'input window, operand 4, single buffered']
    #allocation9 [shape = 's32[1]{0}', space=sflag, size = 0x4, scoped, tag = 'scoped memory for tpu_custom_call.1']
    #allocation10 [shape = 'u8[65536]{0}', space=vmem, size = 0x10000, scoped, tag = 'input window, operand 6, single buffered']
    #allocation11 [shape = 'u8[32768]{0}', space=vmem, size = 0x8000, scoped, tag = 'input window, operand 8, single buffered']
    #allocation12 [shape = 's32[1]{0}', space=sflag, size = 0x4, scoped, tag = 'scoped memory for tpu_custom_call.1']
    #allocation13 [shape = 'u8[8192]{0}', space=vmem, size = 0x2000, scoped, tag = 'output window, operand 0, single buffered']
    %15 = vsyncpa [#allocation3], 0
    %16 = vsyncpa [#allocation6], 0
    %17 = vsyncpa [#allocation9], 0
    %18 = vsyncpa [#allocation12], 0
    %19 = vsyncpa [#allocation4], 0
    // Predicated region
    $region2: #{tpu_custom_call.1} parent=1 // pred_check
      _
    $region3: #{tpu_custom_call.1} parent=1 // pred_check_branch
      %21 = sbr.rel (0) target = $region5
    $region4: #{tpu_custom_call.1} parent=1 // pred_region
      %23 = vsyncadd [#allocation3], 0
      %s24 = sshll.u32 %s0, 4
      %s25 = int_to_ptr.hbm [resolvable:$true] %s24
      %s26 = sshll.u32 [#allocation2], 4
      %s27 = int_to_ptr.vmem [resolvable:$true] %s26
      %32 = dma.hbm_to_vmem [thread:$0]  %s25, 128, %s27, [#allocation3], 64, 64, 4
    $region5: #{tpu_custom_call.1} parent=1 // pred_fallthru
      _
    // Predicated region
    $region6: #{tpu_custom_call.1} parent=1 // pred_check
      _
    $region7: #{tpu_custom_call.1} parent=1 // pred_check_branch
      %34 = sbr.rel (0) target = $region9
    $region8: #{tpu_custom_call.1} parent=1 // pred_region
      %36 = vsyncadd [#allocation6], 0
      %s37 = sshll.u32 %s1, 4
      %s38 = int_to_ptr.hbm [resolvable:$true] %s37
      %s39 = sshll.u32 [#allocation5], 4
      %s40 = int_to_ptr.vmem [resolvable:$true] %s39
      %45 = dma.hbm_to_vmem [thread:$0]  %s38, 384, %s40, [#allocation6], 64, 64, 4
    $region9: #{tpu_custom_call.1} parent=1 // pred_fallthru
      _
    // Predicated region
    $region10: #{tpu_custom_call.1} parent=1 // pred_check
      _
    $region11: #{tpu_custom_call.1} parent=1 // pred_check_branch
      %47 = sbr.rel (0) target = $region13
    $region12: #{tpu_custom_call.1} parent=1 // pred_region
      %49 = vsyncadd [#allocation6], 0
      %s50 = sshll.u32 %s2, 4
      %s51 = int_to_ptr.hbm [resolvable:$true] %s50
      %s52 = sshll.u32 [#allocation7], 4
      %s53 = int_to_ptr.vmem [resolvable:$true] %s52
      %58 = dma.hbm_to_vmem [thread:$0]  %s51, 2048, %s53, [#allocation6], 128, 128, 8
    $region13: #{tpu_custom_call.1} parent=1 // pred_fallthru
      _
    // Predicated region
    $region14: #{tpu_custom_call.1} parent=1 // pred_check
      _
    $region15: #{tpu_custom_call.1} parent=1 // pred_check_branch
      %60 = sbr.rel (0) target = $region17
    $region16: #{tpu_custom_call.1} parent=1 // pred_region
      _
    $region17: #{tpu_custom_call.1} parent=1 // pred_fallthru
      _
    // Predicated region
    $region18: #{tpu_custom_call.1} parent=1 // pred_check
      _
    $region19: #{tpu_custom_call.1} parent=1 // pred_check_branch
      %62 = sbr.rel (0) target = $region21
    $region20: #{tpu_custom_call.1} parent=1 // pred_region
      %64 = vsyncadd [#allocation9], 0
      %s65 = sshll.u32 %s4, 4
      %s66 = int_to_ptr.hbm [resolvable:$true] %s65
      %s67 = sshll.u32 [#allocation8], 4
      %s68 = int_to_ptr.vmem [resolvable:$true] %s67
      %73 = dma.hbm_to_vmem [thread:$0]  %s66, 2048, %s68, [#allocation9], 128, 128, 8
    $region21: #{tpu_custom_call.1} parent=1 // pred_fallthru
      _
    // Predicated region
    $region22: #{tpu_custom_call.1} parent=1 // pred_check
      _
    $region23: #{tpu_custom_call.1} parent=1 // pred_check_branch
      %75 = sbr.rel (0) target = $region25
    $region24: #{tpu_custom_call.1} parent=1 // pred_region
      _
    $region25: #{tpu_custom_call.1} parent=1 // pred_fallthru
      _
    // Predicated region
    $region26: #{tpu_custom_call.1} parent=1 // pred_check
      _
    $region27: #{tpu_custom_call.1} parent=1 // pred_check_branch
      %77 = sbr.rel (0) target = $region29
    $region28: #{tpu_custom_call.1} parent=1 // pred_region
      %79 = vsyncadd [#allocation9], 0
      %s80 = sshll.u32 %s6, 4
      %s81 = int_to_ptr.hbm [resolvable:$true] %s80
      %s82 = sshll.u32 [#allocation10], 4
      %s83 = int_to_ptr.vmem [resolvable:$true] %s82
      %88 = dma.hbm_to_vmem [thread:$0]  %s81, 2048, %s83, [#allocation9], 128, 128, 8
    $region29: #{tpu_custom_call.1} parent=1 // pred_fallthru
      _
    // Predicated region
    $region30: #{tpu_custom_call.1} parent=1 // pred_check
      _
    $region31: #{tpu_custom_call.1} parent=1 // pred_check_branch
      %90 = sbr.rel (0) target = $region33
    $region32: #{tpu_custom_call.1} parent=1 // pred_region
      _
    $region33: #{tpu_custom_call.1} parent=1 // pred_fallthru
      _
    // Predicated region
    $region34: #{tpu_custom_call.1} parent=1 // pred_check
      _
    $region35: #{tpu_custom_call.1} parent=1 // pred_check_branch
      %92 = sbr.rel (0) target = $region37
    $region36: #{tpu_custom_call.1} parent=1 // pred_region
      %94 = vsyncadd [#allocation12], 0
      %s95 = sshll.u32 %s8, 4
      %s96 = int_to_ptr.hbm [resolvable:$true] %s95
      %s97 = sshll.u32 [#allocation11], 4
      %s98 = int_to_ptr.vmem [resolvable:$true] %s97
      %103 = dma.hbm_to_vmem [thread:$0]  %s96, 1024, %s98, [#allocation12], 64, 64, 4
    $region37: #{tpu_custom_call.1} parent=1 // pred_fallthru
      _
    // Predicated region
    $region38: #{tpu_custom_call.1} parent=1 // pred_check
      _
    $region39: #{tpu_custom_call.1} parent=1 // pred_check_branch
      %105 = sbr.rel (0) target = $region41
    $region40: #{tpu_custom_call.1} parent=1 // pred_region
      _
    $region41: #{tpu_custom_call.1} parent=1 // pred_fallthru
      _
    // Predicated region
    $region42: #{tpu_custom_call.1} parent=1 // pred_check
      _
    $region43: #{tpu_custom_call.1} parent=1 // pred_check_branch
      %107 = sbr.rel (0) target = $region45
    $region44: #{tpu_custom_call.1} parent=1 // pred_region
      %109 = dma.done [#allocation3], 128
    $region45: #{tpu_custom_call.1} parent=1 // pred_fallthru
      _
    // Predicated region
    $region46: #{tpu_custom_call.1} parent=1 // pred_check
      _
    $region47: #{tpu_custom_call.1} parent=1 // pred_check_branch
      %111 = sbr.rel (0) target = $region49
    $region48: #{tpu_custom_call.1} parent=1 // pred_region
      %113 = dma.done [#allocation6], 384
    $region49: #{tpu_custom_call.1} parent=1 // pred_fallthru
      _
    // Predicated region
    $region50: #{tpu_custom_call.1} parent=1 // pred_check
      _
    $region51: #{tpu_custom_call.1} parent=1 // pred_check_branch
      %115 = sbr.rel (0) target = $region53
    $region52: #{tpu_custom_call.1} parent=1 // pred_region
      %117 = dma.done [#allocation6], 2048
    $region53: #{tpu_custom_call.1} parent=1 // pred_fallthru
      _
    // Predicated region
    $region54: #{tpu_custom_call.1} parent=1 // pred_check
      _
    $region55: #{tpu_custom_call.1} parent=1 // pred_check_branch
      %119 = sbr.rel (0) target = $region57
    $region56: #{tpu_custom_call.1} parent=1 // pred_region
      %121 = dma.done [#allocation9], 2048
    $region57: #{tpu_custom_call.1} parent=1 // pred_fallthru
      _
    // Predicated region
    $region58: #{tpu_custom_call.1} parent=1 // pred_check
      _
    $region59: #{tpu_custom_call.1} parent=1 // pred_check_branch
      %123 = sbr.rel (0) target = $region61
    $region60: #{tpu_custom_call.1} parent=1 // pred_region
      %125 = dma.done [#allocation9], 2048
    $region61: #{tpu_custom_call.1} parent=1 // pred_fallthru
      _
    // Predicated region
    $region62: #{tpu_custom_call.1} parent=1 // pred_check
      _
    $region63: #{tpu_custom_call.1} parent=1 // pred_check_branch
      %127 = sbr.rel (0) target = $region65
    $region64: #{tpu_custom_call.1} parent=1 // pred_region
      %129 = dma.done [#allocation12], 1024
    $region65: #{tpu_custom_call.1} parent=1 // pred_fallthru
      _
    %v130 = vld [vmem:[#allocation2] sm:$0xf]
    %v131 = vld [vmem:[#allocation2 + $0x4] sm:$0xf]
    %v132 = vld [vmem:[#allocation7] sm:$0xff]
    %v133 = vld [vmem:[#allocation7 + $0x8] sm:$0xff]
    %v134 = vld [vmem:[#allocation7 + $0x10] sm:$0xff]
    %v135 = vld [vmem:[#allocation7 + $0x18] sm:$0xff]
    %v136 = vld [vmem:[#allocation7 + $0x20] sm:$0xff]
    %v137 = vld [vmem:[#allocation7 + $0x28] sm:$0xff]
    %v138 = vld [vmem:[#allocation7 + $0x30] sm:$0xff]
    %v139 = vld [vmem:[#allocation7 + $0x38] sm:$0xff]
    %v140 = vld [vmem:[#allocation7 + $0x40] sm:$0xff]
    %v141 = vld [vmem:[#allocation7 + $0x48] sm:$0xff]
    %v142 = vld [vmem:[#allocation7 + $0x50] sm:$0xff]
    %v143 = vld [vmem:[#allocation7 + $0x58] sm:$0xff]
    %v144 = vld [vmem:[#allocation7 + $0x60] sm:$0xff]
    %v145 = vld [vmem:[#allocation7 + $0x68] sm:$0xff]
    %v146 = vld [vmem:[#allocation7 + $0x70] sm:$0xff]
    %v147 = vld [vmem:[#allocation7 + $0x78] sm:$0xff]
    %v148 = vld [vmem:[%s3] sm:$0x3]
    %v150 = vperm.slane %v148, 0
    %v151 = vperm.slane %v148, 1
    %v156 = vunpack.c.l.b16 %v130
    %v157 = vunpack.c.l.b16 %v131
    %v158 = vpack.c.b16 %v157, %v156
    %v176 = vunpack.c.l.b16 %v132
    %v177 = vunpack.c.h.b16 %v132
    %v178 = vunpack.c.l.b16 %v133
    %v179 = vunpack.c.h.b16 %v133
    %v180 = vunpack.c.l.b16 %v134
    %v181 = vunpack.c.h.b16 %v134
    %v182 = vunpack.c.l.b16 %v135
    %v183 = vunpack.c.h.b16 %v135
    %v184 = vunpack.c.l.b16 %v136
    %v185 = vunpack.c.h.b16 %v136
    %v186 = vunpack.c.l.b16 %v137
    %v187 = vunpack.c.h.b16 %v137
    %v188 = vunpack.c.l.b16 %v138
    %v189 = vunpack.c.h.b16 %v138
    %v190 = vunpack.c.l.b16 %v139
    %v191 = vunpack.c.h.b16 %v139
    %v192 = vunpack.c.l.b16 %v140
    %v193 = vunpack.c.h.b16 %v140
    %v194 = vunpack.c.l.b16 %v141
    %v195 = vunpack.c.h.b16 %v141
    %v196 = vunpack.c.l.b16 %v142
    %v197 = vunpack.c.h.b16 %v142
    %v198 = vunpack.c.l.b16 %v143
    %v199 = vunpack.c.h.b16 %v143
    %v200 = vunpack.c.l.b16 %v144
    %v201 = vunpack.c.h.b16 %v144
    %v202 = vunpack.c.l.b16 %v145
    %v203 = vunpack.c.h.b16 %v145
    %v204 = vunpack.c.l.b16 %v146
    %v205 = vunpack.c.h.b16 %v146
    %v206 = vunpack.c.l.b16 %v147
    %v207 = vunpack.c.h.b16 %v147
    %v208 = vpack.c.b16 %v178, %v176
    %v209 = vpack.c.b16 %v179, %v177
    %v210 = vpack.c.b16 %v182, %v180
    %v211 = vpack.c.b16 %v183, %v181
    %v212 = vpack.c.b16 %v186, %v184
    %v213 = vpack.c.b16 %v187, %v185
    %v214 = vpack.c.b16 %v190, %v188
    %v215 = vpack.c.b16 %v191, %v189
    %v216 = vpack.c.b16 %v194, %v192
    %v217 = vpack.c.b16 %v195, %v193
    %v218 = vpack.c.b16 %v198, %v196
    %v219 = vpack.c.b16 %v199, %v197
    %v220 = vpack.c.b16 %v202, %v200
    %v221 = vpack.c.b16 %v203, %v201
    %v222 = vpack.c.b16 %v206, %v204
    %v223 = vpack.c.b16 %v207, %v205
    %240 = vmatpush.bf16.msra.mxu0 %v222
    %241 = vmatpush.bf16.msra.mxu0 %v220
    %242 = vmatpush.bf16.msra.mxu0 %v218
    %243 = vmatpush.bf16.msra.mxu0 %v216
    %244 = vmatpush.bf16.msra.mxu0 %v214
    %245 = vmatpush.bf16.msra.mxu0 %v212
    %246 = vmatpush.bf16.msra.mxu0 %v210
    %247 = vmatpush.bf16.msra.mxu0 %v208
    %248 = vmatmul.bf16.gmra.mxu0 %v158
    %v249 = vpop.f32.mrf.mxu0
    %v250 = vadd.f32 %v150, %v249
    %v251 = vpop.f32.mrf.mxu0
    %v252 = vadd.f32 %v150, %v251
    %253 = vdwg.mxu0
    %254 = vmatpush.bf16.msra.mxu0 %v223
    %255 = vmatpush.bf16.msra.mxu0 %v221
    %256 = vmatpush.bf16.msra.mxu0 %v219
    %257 = vmatpush.bf16.msra.mxu0 %v217
    %258 = vmatpush.bf16.msra.mxu0 %v215
    %259 = vmatpush.bf16.msra.mxu0 %v213
    %260 = vmatpush.bf16.msra.mxu0 %v211
    %261 = vmatpush.bf16.msra.mxu0 %v209
    %262 = vmatmul.bf16.gmra.mxu0 %v158
    %v263 = vpop.f32.mrf.mxu0
    %v264 = vadd.f32 %v151, %v263
    %v265 = vpop.f32.mrf.mxu0
    %v266 = vadd.f32 %v151, %v265
    %267 = vdwg.mxu0
    %v268 = vtanh.pop %v250
    %v269 = vtanh.pop %v264
    %v270 = vtanh.pop %v252
    %v271 = vtanh.pop %v266
    %v272 = vmul.f32 %v269, 0.5
    %v273 = vmul.f32 %v271, 0.5
    %v274 = vadd.f32 %v272, 0.5
    %v275 = vadd.f32 %v273, 0.5
    %v276 = vmul.f32 %v268, %v274
    %v277 = vmul.f32 %v270, %v275
    %v278 = vpack.c.bf16 %v276, %v276
    %v279 = vpack.c.bf16 %v277, %v277
    %v280 = vld [vmem:[#allocation5] sm:$0xf]
    %v281 = vld [vmem:[#allocation5 + $0x4] sm:$0xf]
    %v282 = vld [vmem:[#allocation5 + $0x8] sm:$0xf]
    %v283 = vld [vmem:[#allocation5 + $0xc] sm:$0xf]
    %v284 = vld [vmem:[#allocation5 + $0x10] sm:$0xf]
    %v285 = vld [vmem:[#allocation5 + $0x14] sm:$0xf]
    %v286 = vld [vmem:[#allocation8] sm:$0xff]
    %v287 = vld [vmem:[#allocation8 + $0x8] sm:$0xff]
    %v288 = vld [vmem:[#allocation8 + $0x10] sm:$0xff]
    %v289 = vld [vmem:[#allocation8 + $0x18] sm:$0xff]
    %v290 = vld [vmem:[#allocation8 + $0x20] sm:$0xff]
    %v291 = vld [vmem:[#allocation8 + $0x28] sm:$0xff]
    %v292 = vld [vmem:[#allocation8 + $0x30] sm:$0xff]
    %v293 = vld [vmem:[#allocation8 + $0x38] sm:$0xff]
    %v294 = vld [vmem:[#allocation8 + $0x40] sm:$0xff]
    %v295 = vld [vmem:[#allocation8 + $0x48] sm:$0xff]
    %v296 = vld [vmem:[#allocation8 + $0x50] sm:$0xff]
    %v297 = vld [vmem:[#allocation8 + $0x58] sm:$0xff]
    %v298 = vld [vmem:[#allocation8 + $0x60] sm:$0xff]
    %v299 = vld [vmem:[#allocation8 + $0x68] sm:$0xff]
    %v300 = vld [vmem:[#allocation8 + $0x70] sm:$0xff]
    %v301 = vld [vmem:[#allocation8 + $0x78] sm:$0xff]
    %v302 = vld [vmem:[%s5] sm:$0x3]
    %v304 = vperm.slane %v302, 0
    %v305 = vperm.slane %v302, 1
    %v314 = vunpack.c.l.b16 %v280
    %v315 = vunpack.c.l.b16 %v281
    %v316 = vunpack.c.l.b16 %v282
    %v317 = vunpack.c.l.b16 %v283
    %v318 = vunpack.c.l.b16 %v284
    %v319 = vunpack.c.l.b16 %v285
    %v320 = vpack.c.b16 %v315, %v314
    %v321 = vpack.c.b16 %v317, %v316
    %v322 = vpack.c.b16 %v319, %v318
    %v342 = vunpack.c.l.b16 %v286
    %v343 = vunpack.c.h.b16 %v286
    %v344 = vunpack.c.l.b16 %v287
    %v345 = vunpack.c.h.b16 %v287
    %v346 = vunpack.c.l.b16 %v288
    %v347 = vunpack.c.h.b16 %v288
    %v348 = vunpack.c.l.b16 %v289
    %v349 = vunpack.c.h.b16 %v289
    %v350 = vunpack.c.l.b16 %v290
    %v351 = vunpack.c.h.b16 %v290
    %v352 = vunpack.c.l.b16 %v291
    %v353 = vunpack.c.h.b16 %v291
    %v354 = vunpack.c.l.b16 %v292
    %v355 = vunpack.c.h.b16 %v292
    %v356 = vunpack.c.l.b16 %v293
    %v357 = vunpack.c.h.b16 %v293
    %v358 = vunpack.c.l.b16 %v294
    %v359 = vunpack.c.h.b16 %v294
    %v360 = vunpack.c.l.b16 %v295
    %v361 = vunpack.c.h.b16 %v295
    %v362 = vunpack.c.l.b16 %v296
    %v363 = vunpack.c.h.b16 %v296
    %v364 = vunpack.c.l.b16 %v297
    %v365 = vunpack.c.h.b16 %v297
    %v366 = vunpack.c.l.b16 %v298
    %v367 = vunpack.c.h.b16 %v298
    %v368 = vunpack.c.l.b16 %v299
    %v369 = vunpack.c.h.b16 %v299
    %v370 = vunpack.c.l.b16 %v300
    %v371 = vunpack.c.h.b16 %v300
    %v372 = vunpack.c.l.b16 %v301
    %v373 = vunpack.c.h.b16 %v301
    %v374 = vpack.c.b16 %v344, %v342
    %v375 = vpack.c.b16 %v345, %v343
    %v376 = vpack.c.b16 %v348, %v346
    %v377 = vpack.c.b16 %v349, %v347
    %v378 = vpack.c.b16 %v352, %v350
    %v379 = vpack.c.b16 %v353, %v351
    %v380 = vpack.c.b16 %v356, %v354
    %v381 = vpack.c.b16 %v357, %v355
    %v382 = vpack.c.b16 %v360, %v358
    %v383 = vpack.c.b16 %v361, %v359
    %v384 = vpack.c.b16 %v364, %v362
    %v385 = vpack.c.b16 %v365, %v363
    %v386 = vpack.c.b16 %v368, %v366
    %v387 = vpack.c.b16 %v369, %v367
    %v388 = vpack.c.b16 %v372, %v370
    %v389 = vpack.c.b16 %v373, %v371
    %406 = vmatpush.bf16.msra.mxu0 %v388
    %407 = vmatpush.bf16.msra.mxu0 %v386
    %408 = vmatpush.bf16.msra.mxu0 %v384
    %409 = vmatpush.bf16.msra.mxu0 %v382
    %410 = vmatpush.bf16.msra.mxu0 %v380
    %411 = vmatpush.bf16.msra.mxu0 %v378
    %412 = vmatpush.bf16.msra.mxu0 %v376
    %413 = vmatpush.bf16.msra.mxu0 %v374
    %414 = vmatmul.bf16.gmra.mxu0 %v320
    %v415 = vpop.f32.mrf.mxu0
    %v416 = vadd.f32 %v304, %v415
    %v417 = vpop.f32.mrf.mxu0
    %v418 = vadd.f32 %v304, %v417
    %419 = vmatmul.bf16.gmra.mxu0 %v321
    %v420 = vpop.f32.mrf.mxu0
    %v421 = vadd.f32 %v304, %v420
    %v422 = vpop.f32.mrf.mxu0
    %v423 = vadd.f32 %v304, %v422
    %424 = vmatmul.bf16.gmra.mxu0 %v322
    %v425 = vpop.f32.mrf.mxu0
    %v426 = vadd.f32 %v304, %v425
    %v427 = vpop.f32.mrf.mxu0
    %v428 = vadd.f32 %v304, %v427
    %429 = vdwg.mxu0
    %430 = vmatpush.bf16.msra.mxu0 %v389
    %431 = vmatpush.bf16.msra.mxu0 %v387
    %432 = vmatpush.bf16.msra.mxu0 %v385
    %433 = vmatpush.bf16.msra.mxu0 %v383
    %434 = vmatpush.bf16.msra.mxu0 %v381
    %435 = vmatpush.bf16.msra.mxu0 %v379
    %436 = vmatpush.bf16.msra.mxu0 %v377
    %437 = vmatpush.bf16.msra.mxu0 %v375
    %438 = vmatmul.bf16.gmra.mxu0 %v320
    %v439 = vpop.f32.mrf.mxu0
    %v440 = vadd.f32 %v305, %v439
    %v441 = vpop.f32.mrf.mxu0
    %v442 = vadd.f32 %v305, %v441
    %443 = vmatmul.bf16.gmra.mxu0 %v321
    %v444 = vpop.f32.mrf.mxu0
    %v445 = vadd.f32 %v305, %v444
    %v446 = vpop.f32.mrf.mxu0
    %v447 = vadd.f32 %v305, %v446
    %448 = vmatmul.bf16.gmra.mxu0 %v322
    %v449 = vpop.f32.mrf.mxu0
    %v450 = vadd.f32 %v305, %v449
    %v451 = vpop.f32.mrf.mxu0
    %v452 = vadd.f32 %v305, %v451
    %453 = vdwg.mxu0
    %v454 = vtanh.pop %v416
    %v455 = vtanh.pop %v440
    %v456 = vtanh.pop %v418
    %v457 = vtanh.pop %v442
    %v458 = vtanh.pop %v421
    %v459 = vtanh.pop %v445
    %v460 = vtanh.pop %v423
    %v461 = vtanh.pop %v447
    %v462 = vtanh.pop %v426
    %v463 = vtanh.pop %v450
    %v464 = vtanh.pop %v428
    %v465 = vtanh.pop %v452
    %v466 = vmul.f32 %v455, 0.5
    %v467 = vmul.f32 %v457, 0.5
    %v468 = vmul.f32 %v459, 0.5
    %v469 = vmul.f32 %v461, 0.5
    %v470 = vmul.f32 %v463, 0.5
    %v471 = vmul.f32 %v465, 0.5
    %v472 = vadd.f32 %v466, 0.5
    %v473 = vadd.f32 %v467, 0.5
    %v474 = vadd.f32 %v468, 0.5
    %v475 = vadd.f32 %v469, 0.5
    %v476 = vadd.f32 %v470, 0.5
    %v477 = vadd.f32 %v471, 0.5
    %v478 = vmul.f32 %v454, %v472
    %v479 = vmul.f32 %v456, %v473
    %v480 = vmul.f32 %v458, %v474
    %v481 = vmul.f32 %v460, %v475
    %v482 = vmul.f32 %v462, %v476
    %v483 = vmul.f32 %v464, %v477
    %v484 = vpack.c.bf16 %v478, %v478
    %v485 = vpack.c.bf16 %v479, %v479
    %v486 = vpack.c.bf16 %v480, %v480
    %v487 = vpack.c.bf16 %v481, %v481
    %v488 = vpack.c.bf16 %v482, %v482
    %v489 = vpack.c.bf16 %v483, %v483
    %v490 = vunpack.c.l.bf16 %v484
    %v491 = vunpack.c.l.bf16 %v485
    %v492 = vunpack.c.l.bf16 %v486
    %v493 = vunpack.c.l.bf16 %v487
    %v494 = vunpack.c.l.bf16 %v488
    %v495 = vunpack.c.l.bf16 %v489
    %v496 = vunpack.c.l.bf16 %v278
    %v497 = vunpack.c.l.bf16 %v279
    %v498 = vmul.f32 %v490, %v496
    %v499 = vmul.f32 %v491, %v497
    %v500 = vmul.f32 %v492, %v496
    %v501 = vmul.f32 %v493, %v497
    %v502 = vmul.f32 %v494, %v496
    %v503 = vmul.f32 %v495, %v497
    %v504 = vpack.c.bf16 %v498, %v498
    %v505 = vpack.c.bf16 %v499, %v499
    %v506 = vpack.c.bf16 %v500, %v500
    %v507 = vpack.c.bf16 %v501, %v501
    %v508 = vpack.c.bf16 %v502, %v502
    %v509 = vpack.c.bf16 %v503, %v503
    %v510 = vld [vmem:[#allocation10] sm:$0xff]
    %v511 = vld [vmem:[#allocation10 + $0x8] sm:$0xff]
    %v512 = vld [vmem:[#allocation10 + $0x10] sm:$0xff]
    %v513 = vld [vmem:[#allocation10 + $0x18] sm:$0xff]
    %v514 = vld [vmem:[#allocation10 + $0x20] sm:$0xff]
    %v515 = vld [vmem:[#allocation10 + $0x28] sm:$0xff]
    %v516 = vld [vmem:[#allocation10 + $0x30] sm:$0xff]
    %v517 = vld [vmem:[#allocation10 + $0x38] sm:$0xff]
    %v518 = vld [vmem:[#allocation10 + $0x40] sm:$0xff]
    %v519 = vld [vmem:[#allocation10 + $0x48] sm:$0xff]
    %v520 = vld [vmem:[#allocation10 + $0x50] sm:$0xff]
    %v521 = vld [vmem:[#allocation10 + $0x58] sm:$0xff]
    %v522 = vld [vmem:[#allocation10 + $0x60] sm:$0xff]
    %v523 = vld [vmem:[#allocation10 + $0x68] sm:$0xff]
    %v524 = vld [vmem:[#allocation10 + $0x70] sm:$0xff]
    %v525 = vld [vmem:[#allocation10 + $0x78] sm:$0xff]
    %v526 = vld [vmem:[%s7] sm:$0x3]
    %v528 = vperm.slane %v526, 0
    %v529 = vperm.slane %v526, 1
    %v538 = vunpack.c.l.b16 %v504
    %v539 = vunpack.c.l.b16 %v505
    %v540 = vunpack.c.l.b16 %v506
    %v541 = vunpack.c.l.b16 %v507
    %v542 = vunpack.c.l.b16 %v508
    %v543 = vunpack.c.l.b16 %v509
    %v544 = vpack.c.b16 %v539, %v538
    %v545 = vpack.c.b16 %v541, %v540
    %v546 = vpack.c.b16 %v543, %v542
    %v566 = vunpack.c.l.b16 %v510
    %v567 = vunpack.c.h.b16 %v510
    %v568 = vunpack.c.l.b16 %v511
    %v569 = vunpack.c.h.b16 %v511
    %v570 = vunpack.c.l.b16 %v512
    %v571 = vunpack.c.h.b16 %v512
    %v572 = vunpack.c.l.b16 %v513
    %v573 = vunpack.c.h.b16 %v513
    %v574 = vunpack.c.l.b16 %v514
    %v575 = vunpack.c.h.b16 %v514
    %v576 = vunpack.c.l.b16 %v515
    %v577 = vunpack.c.h.b16 %v515
    %v578 = vunpack.c.l.b16 %v516
    %v579 = vunpack.c.h.b16 %v516
    %v580 = vunpack.c.l.b16 %v517
    %v581 = vunpack.c.h.b16 %v517
    %v582 = vunpack.c.l.b16 %v518
    %v583 = vunpack.c.h.b16 %v518
    %v584 = vunpack.c.l.b16 %v519
    %v585 = vunpack.c.h.b16 %v519
    %v586 = vunpack.c.l.b16 %v520
    %v587 = vunpack.c.h.b16 %v520
    %v588 = vunpack.c.l.b16 %v521
    %v589 = vunpack.c.h.b16 %v521
    %v590 = vunpack.c.l.b16 %v522
    %v591 = vunpack.c.h.b16 %v522
    %v592 = vunpack.c.l.b16 %v523
    %v593 = vunpack.c.h.b16 %v523
    %v594 = vunpack.c.l.b16 %v524
    %v595 = vunpack.c.h.b16 %v524
    %v596 = vunpack.c.l.b16 %v525
    %v597 = vunpack.c.h.b16 %v525
    %v598 = vpack.c.b16 %v568, %v566
    %v599 = vpack.c.b16 %v569, %v567
    %v600 = vpack.c.b16 %v572, %v570
    %v601 = vpack.c.b16 %v573, %v571
    %v602 = vpack.c.b16 %v576, %v574
    %v603 = vpack.c.b16 %v577, %v575
    %v604 = vpack.c.b16 %v580, %v578
    %v605 = vpack.c.b16 %v581, %v579
    %v606 = vpack.c.b16 %v584, %v582
    %v607 = vpack.c.b16 %v585, %v583
    %v608 = vpack.c.b16 %v588, %v586
    %v609 = vpack.c.b16 %v589, %v587
    %v610 = vpack.c.b16 %v592, %v590
    %v611 = vpack.c.b16 %v593, %v591
    %v612 = vpack.c.b16 %v596, %v594
    %v613 = vpack.c.b16 %v597, %v595
    %630 = vmatpush.bf16.msra.mxu0 %v612
    %631 = vmatpush.bf16.msra.mxu0 %v610
    %632 = vmatpush.bf16.msra.mxu0 %v608
    %633 = vmatpush.bf16.msra.mxu0 %v606
    %634 = vmatpush.bf16.msra.mxu0 %v604
    %635 = vmatpush.bf16.msra.mxu0 %v602
    %636 = vmatpush.bf16.msra.mxu0 %v600
    %637 = vmatpush.bf16.msra.mxu0 %v598
    %638 = vmatmul.bf16.gmra.mxu0 %v544
    %v639 = vpop.f32.mrf.mxu0
    %v640 = vadd.f32 %v528, %v639
    %v641 = vpop.f32.mrf.mxu0
    %v642 = vadd.f32 %v528, %v641
    %643 = vmatmul.bf16.gmra.mxu0 %v545
    %v644 = vpop.f32.mrf.mxu0
    %v645 = vadd.f32 %v528, %v644
    %v646 = vpop.f32.mrf.mxu0
    %v647 = vadd.f32 %v528, %v646
    %648 = vmatmul.bf16.gmra.mxu0 %v546
    %v649 = vpop.f32.mrf.mxu0
    %v650 = vadd.f32 %v528, %v649
    %v651 = vpop.f32.mrf.mxu0
    %v652 = vadd.f32 %v528, %v651
    %653 = vdwg.mxu0
    %654 = vmatpush.bf16.msra.mxu0 %v613
    %655 = vmatpush.bf16.msra.mxu0 %v611
    %656 = vmatpush.bf16.msra.mxu0 %v609
    %657 = vmatpush.bf16.msra.mxu0 %v607
    %658 = vmatpush.bf16.msra.mxu0 %v605
    %659 = vmatpush.bf16.msra.mxu0 %v603
    %660 = vmatpush.bf16.msra.mxu0 %v601
    %661 = vmatpush.bf16.msra.mxu0 %v599
    %662 = vmatmul.bf16.gmra.mxu0 %v544
    %v663 = vpop.f32.mrf.mxu0
    %v664 = vadd.f32 %v529, %v663
    %v665 = vpop.f32.mrf.mxu0
    %v666 = vadd.f32 %v529, %v665
    %667 = vmatmul.bf16.gmra.mxu0 %v545
    %v668 = vpop.f32.mrf.mxu0
    %v669 = vadd.f32 %v529, %v668
    %v670 = vpop.f32.mrf.mxu0
    %v671 = vadd.f32 %v529, %v670
    %672 = vmatmul.bf16.gmra.mxu0 %v546
    %v673 = vpop.f32.mrf.mxu0
    %v674 = vadd.f32 %v529, %v673
    %v675 = vpop.f32.mrf.mxu0
    %v676 = vadd.f32 %v529, %v675
    %677 = vdwg.mxu0
    %v678 = vtanh.pop %v640
    %v679 = vtanh.pop %v664
    %v680 = vtanh.pop %v642
    %v681 = vtanh.pop %v666
    %v682 = vtanh.pop %v645
    %v683 = vtanh.pop %v669
    %v684 = vtanh.pop %v647
    %v685 = vtanh.pop %v671
    %v686 = vtanh.pop %v650
    %v687 = vtanh.pop %v674
    %v688 = vtanh.pop %v652
    %v689 = vtanh.pop %v676
    %v690 = vmul.f32 %v679, 0.5
    %v691 = vmul.f32 %v681, 0.5
    %v692 = vmul.f32 %v683, 0.5
    %v693 = vmul.f32 %v685, 0.5
    %v694 = vmul.f32 %v687, 0.5
    %v695 = vmul.f32 %v689, 0.5
    %v696 = vadd.f32 %v690, 0.5
    %v697 = vadd.f32 %v691, 0.5
    %v698 = vadd.f32 %v692, 0.5
    %v699 = vadd.f32 %v693, 0.5
    %v700 = vadd.f32 %v694, 0.5
    %v701 = vadd.f32 %v695, 0.5
    %v702 = vmul.f32 %v678, %v696
    %v703 = vmul.f32 %v680, %v697
    %v704 = vmul.f32 %v682, %v698
    %v705 = vmul.f32 %v684, %v699
    %v706 = vmul.f32 %v686, %v700
    %v707 = vmul.f32 %v688, %v701
    %v708 = vpack.c.bf16 %v702, %v702
    %v709 = vpack.c.bf16 %v703, %v703
    %v710 = vpack.c.bf16 %v704, %v704
    %v711 = vpack.c.bf16 %v705, %v705
    %v712 = vpack.c.bf16 %v706, %v706
    %v713 = vpack.c.bf16 %v707, %v707
    %v714 = vunpack.c.l.bf16 %v708
    %v715 = vunpack.c.l.bf16 %v709
    %v716 = vunpack.c.l.bf16 %v710
    %v717 = vunpack.c.l.bf16 %v711
    %v718 = vunpack.c.l.bf16 %v712
    %v719 = vunpack.c.l.bf16 %v713
    %v720 = vadd.f32 %v714, %v716
    %v721 = vadd.f32 %v720, %v718
    %v722 = vadd.f32 %v715, %v717
    %v723 = vadd.f32 %v722, %v719
    %v724 = vpack.c.bf16 %v723, %v721
    %v725 = vld [vmem:[#allocation11] sm:$0xf]
    %v726 = vld [vmem:[#allocation11 + $0x4] sm:$0xf]
    %v727 = vld [vmem:[#allocation11 + $0x8] sm:$0xf]
    %v728 = vld [vmem:[#allocation11 + $0xc] sm:$0xf]
    %v729 = vld [vmem:[#allocation11 + $0x10] sm:$0xf]
    %v730 = vld [vmem:[#allocation11 + $0x14] sm:$0xf]
    %v731 = vld [vmem:[#allocation11 + $0x18] sm:$0xf]
    %v732 = vld [vmem:[#allocation11 + $0x1c] sm:$0xf]
    %v733 = vld [vmem:[#allocation11 + $0x20] sm:$0xf]
    %v734 = vld [vmem:[#allocation11 + $0x24] sm:$0xf]
    %v735 = vld [vmem:[#allocation11 + $0x28] sm:$0xf]
    %v736 = vld [vmem:[#allocation11 + $0x2c] sm:$0xf]
    %v737 = vld [vmem:[#allocation11 + $0x30] sm:$0xf]
    %v738 = vld [vmem:[#allocation11 + $0x34] sm:$0xf]
    %v739 = vld [vmem:[#allocation11 + $0x38] sm:$0xf]
    %v740 = vld [vmem:[#allocation11 + $0x3c] sm:$0xf]
    %v741 = vld [vmem:[%s9] sm:$0x1]
    %v742 = vmul.f32 %v741, 3.0
    %v744 = vperm.slane %v742, 0
    %v762 = vunpack.c.l.b16 %v725
    %v763 = vunpack.c.l.b16 %v726
    %v764 = vunpack.c.l.b16 %v727
    %v765 = vunpack.c.l.b16 %v728
    %v766 = vunpack.c.l.b16 %v729
    %v767 = vunpack.c.l.b16 %v730
    %v768 = vunpack.c.l.b16 %v731
    %v769 = vunpack.c.l.b16 %v732
    %v770 = vunpack.c.l.b16 %v733
    %v771 = vunpack.c.l.b16 %v734
    %v772 = vunpack.c.l.b16 %v735
    %v773 = vunpack.c.l.b16 %v736
    %v774 = vunpack.c.l.b16 %v737
    %v775 = vunpack.c.l.b16 %v738
    %v776 = vunpack.c.l.b16 %v739
    %v777 = vunpack.c.l.b16 %v740
    %v778 = vpack.c.b16 %v763, %v762
    %v779 = vpack.c.b16 %v765, %v764
    %v780 = vpack.c.b16 %v767, %v766
    %v781 = vpack.c.b16 %v769, %v768
    %v782 = vpack.c.b16 %v771, %v770
    %v783 = vpack.c.b16 %v773, %v772
    %v784 = vpack.c.b16 %v775, %v774
    %v785 = vpack.c.b16 %v777, %v776
    %794 = vmatpush.bf16.msra.mxu0 %v785
    %795 = vmatpush.bf16.msra.mxu0 %v784
    %796 = vmatpush.bf16.msra.mxu0 %v783
    %797 = vmatpush.bf16.msra.mxu0 %v782
    %798 = vmatpush.bf16.msra.mxu0 %v781
    %799 = vmatpush.bf16.msra.mxu0 %v780
    %800 = vmatpush.bf16.msra.mxu0 %v779
    %801 = vmatpush.bf16.msra.mxu0 %v778
    %802 = vmatmul.bf16.gmra.mxu0 %v724
    %v803 = vpop.f32.mrf.mxu0
    %v804 = vadd.f32 %v744, %v803
    %v805 = vpop.f32.mrf.mxu0
    %v806 = vadd.f32 %v744, %v805
    %807 = vdwg.mxu0
    %808 = vst [vmem:[#allocation13] sm:$0xff] %v804
    %809 = vst [vmem:[#allocation13 + $0x8] sm:$0xff] %v806
    // Predicated region
    $region66: #{tpu_custom_call.1} parent=1 // pred_check
      _
    $region67: #{tpu_custom_call.1} parent=1 // pred_check_branch
      %811 = sbr.rel (0) target = $region69
    $region68: #{tpu_custom_call.1} parent=1 // pred_region
      %813 = vsyncadd [#allocation4], 0
      %s814 = sshll.u32 [#allocation13], 4
      %s815 = int_to_ptr.vmem [resolvable:$true] %s814
      %s816 = sshll.u32 %s10, 4
      %s817 = int_to_ptr.hbm [resolvable:$true] %s816
      %822 = dma.vmem_to_hbm [thread:$0]  %s815, 256, %s817, [#allocation4], 128, 128, 8
    $region69: #{tpu_custom_call.1} parent=1 // pred_fallthru
      _
    // Predicated region
    $region70: #{tpu_custom_call.1} parent=1 // pred_check
      _
    $region71: #{tpu_custom_call.1} parent=1 // pred_check_branch
      %824 = sbr.rel (0) target = $region73
    $region72: #{tpu_custom_call.1} parent=1 // pred_region
      %826 = dma.done [#allocation4], 256
    $region73: #{tpu_custom_call.1} parent=1 // pred_fallthru
      _
    %827 = vsyncpa [#allocation3], 1
    %828 = vsyncpa [#allocation6], 1
    %829 = vsyncpa [#allocation9], 1
    %830 = vsyncpa [#allocation12], 1
    %831 = vsyncpa [#allocation4], 1

</llo_original>
